<compile_context>
chip_gen: v7x
topology: tpu7x:2x2x1
jax: 0.10.0
libtpu: 0.0.40
codegen_flags: <defaults>
</compile_context>

<pallas_src>
import math

import numpy as np
import jax
import jax.numpy as jnp
from jax.experimental import pallas as pl
from jax.experimental.pallas import tpu as pltpu


def _vmem():
    return pl.BlockSpec(memory_space=pltpu.MemorySpace.VMEM)


def _smem():
    return pl.BlockSpec(memory_space=pltpu.MemorySpace.SMEM)


# ----------------------------------------------------------------------------
# Fused per-layer kernel:
#   M      = D^-1/2 (sum_k c_k A^k) D^-1/2          (MET matrix, row-degree D)
#   Xc     = relu((M @ X) @ W + b)                  (PANConv + ReLU)
#   score  = tanh(beta0 * (Xc . p) + beta1 * colsum(M))   (PANPooling score)
#   Xs     = Xc * score                             (row scaling; gather later)
# ----------------------------------------------------------------------------
def pan_layer(adj, x, coef, w_t, b, p_row, beta):
    n = adj.shape[0]
    f_in = x.shape[1]
    f_out = w_t.shape[1]
    num_terms = int(coef.shape[0])  # L + 1

    def kernel(coef_ref, beta_ref, adj_ref, x_ref, w_ref, b_ref, p_ref,
               xs_ref, score_ref, m_ref):
        a = adj_ref[...]
        a_bf = a.astype(jnp.bfloat16)

        # ---- MET matrix  m = sum_k coef[k] * A^k --------------------------
        # A^0 = I via an iota mask (no jnp.eye matmul, no identity warm-up
        # dot); A^k chain in bf16 (entries are small integer path counts,
        # exact in bf16) with f32 accumulation on the MXU.
        eye = (jax.lax.broadcasted_iota(jnp.int32, (n, n), 0) ==
               jax.lax.broadcasted_iota(jnp.int32, (n, n), 1)).astype(jnp.float32)
        m = coef_ref[0] * eye
        if num_terms > 1:
            m = m + coef_ref[1] * a
        tmp = a_bf
        for k in range(2, num_terms):
            tmp_f = jnp.dot(tmp, a_bf, preferred_element_type=jnp.float32)
            m = m + coef_ref[k] * tmp_f
            if k + 1 < num_terms:
                tmp = tmp_f.astype(jnp.bfloat16)

        # ---- symmetric normalization with row degree (VPU broadcasts) -----
        deg = jnp.sum(m, axis=1, keepdims=True)                      # [N, 1]
        # same row sums laid out along lanes:  ones @ M^T  -> [1, N]
        deg_t = jax.lax.dot_general(
            jnp.ones((1, n), jnp.float32), m,
            dimension_numbers=(((1,), (1,)), ((), ())),
            preferred_element_type=jnp.float32)                      # [1, N]
        d = jnp.where(deg > 0.0, jax.lax.rsqrt(deg), 0.0)            # [N, 1]
        d_t = jnp.where(deg_t > 0.0, jax.lax.rsqrt(deg_t), 0.0)      # [1, N]
        m_norm = (d * m) * d_t        # diag(d) @ M @ diag(d), no N^3 matmul
        m_ref[...] = m_norm

        # ---- PANConv: relu((M @ X) @ W + b) (f32) --------------------------
        mx = jnp.dot(m_norm, x_ref[...], preferred_element_type=jnp.float32)
        h = jnp.dot(mx, w_ref[...], preferred_element_type=jnp.float32) + b_ref[...]
        x_conv = jnp.maximum(h, 0.0)                                 # fused ReLU

        # ---- PANPooling score + row scaling (fused epilogue) ---------------
        s1 = jnp.sum(x_conv * p_ref[...], axis=1, keepdims=True)     # [N, 1]
        s2 = jax.lax.dot_general(                                    # colsum(M) -> [N, 1]
            m_norm, jnp.ones((n, 1), jnp.float32),
            dimension_numbers=(((0,), (0,)), ((), ())),
            preferred_element_type=jnp.float32)
        score = jnp.tanh(beta_ref[0] * s1 + beta_ref[1] * s2)
        score_ref[...] = score
        xs_ref[...] = x_conv * score   # pre-scale all rows; gather later in JAX

    cost = pl.CostEstimate(
        flops=(2 * n * n * n * max(num_terms - 2, 0)       # A^k power chain
               + 2 * n * n * f_in                           # M @ X
               + 2 * n * f_in * f_out                       # X @ W
               + 4 * n * n),                                # deg_t / colsum dots
        transcendentals=3 * n,                              # 2x rsqrt + tanh
        bytes_accessed=4 * (2 * n * n + n * f_in + f_in * f_out
                            + 2 * f_out + n * f_out + 2 * n),
    )

    return pl.pallas_call(
        kernel,
        out_shape=(
            jax.ShapeDtypeStruct((n, f_out), jnp.float32),   # x_conv * score
            jax.ShapeDtypeStruct((n, 1), jnp.float32),       # score
            jax.ShapeDtypeStruct((n, n), jnp.float32),       # normalized M
        ),
        in_specs=[_smem(), _smem(), _vmem(), _vmem(), _vmem(), _vmem(), _vmem()],
        out_specs=(_vmem(), _vmem(), _vmem()),
        cost_estimate=cost,
    )(coef, beta, adj, x, w_t, b, p_row)


# ----------------------------------------------------------------------------
# global_mean_pool (as segment matmul) + FC head (Linear/ReLU x2, Linear)
# ----------------------------------------------------------------------------
def readout_mlp(sel, x, w1, b1, w2, b2, w3, b3):
    g = sel.shape[0]
    c = w3.shape[1]

    def kernel(sel_ref, x_ref, w1_ref, b1_ref, w2_ref, b2_ref, w3_ref, b3_ref, o_ref):
        pooled = jnp.dot(sel_ref[...], x_ref[...], preferred_element_type=jnp.float32)
        h = jnp.dot(pooled, w1_ref[...], preferred_element_type=jnp.float32) + b1_ref[...]
        h = jnp.maximum(h, 0.0)
        h = jnp.dot(h, w2_ref[...], preferred_element_type=jnp.float32) + b2_ref[...]
        h = jnp.maximum(h, 0.0)
        o_ref[...] = jnp.dot(h, w3_ref[...], preferred_element_type=jnp.float32) + b3_ref[...]

    return pl.pallas_call(
        kernel,
        out_shape=jax.ShapeDtypeStruct((g, c), jnp.float32),
        in_specs=[_vmem()] * 8,
        out_specs=_vmem(),
    )(sel, x, w1, b1, w2, b2, w3, b3)


# ----------------------------------------------------------------------------
# topk node selection per graph (torch_geometric.nn.pool.topk semantics)
# data-dependent gather -> plain JAX glue.  counts are static python ints.
# ----------------------------------------------------------------------------
def topk_select(score_vec, counts, ratio):
    batch_np = np.concatenate(
        [np.full(c, g, np.int32) for g, c in enumerate(counts)]
    )
    order = jnp.argsort(-score_vec)                       # descending score
    b_of_order = jnp.asarray(batch_np)[order]
    order2 = jnp.argsort(b_of_order, stable=True)         # group by graph, keep order
    perm_full = order[order2]
    perms, new_counts, off = [], [], 0
    for n_g in counts:
        k_g = int(math.ceil(ratio * n_g))
        perms.append(perm_full[off:off + k_g])
        new_counts.append(k_g)
        off += n_g
    return jnp.concatenate(perms), new_counts


# ----------------------------------------------------------------------------
# Full PANPool forward
# ----------------------------------------------------------------------------
def pan_pool_forward(x, adj, counts, conv_params, pool_params, fc_params, ratio):
    cur_x, cur_adj, cur_counts = x, adj, list(counts)
    for (coef, w_t, b), (p_row, beta) in zip(conv_params, pool_params):
        # fused: conv + relu + pooling score + row scaling
        x_scaled, score, m = pan_layer(cur_adj, cur_x, coef, w_t, b, p_row, beta)
        perm, cur_counts = topk_select(score[:, 0], cur_counts, ratio)
        cur_x = jnp.take(x_scaled, perm, axis=0)          # gather pre-scaled rows
        m_sel = jnp.take(jnp.take(m, perm, axis=0), perm, axis=1)
        # next layer's (binary) adjacency = structure of filtered M, transposed
        cur_adj = (m_sel > 0.0).astype(jnp.float32).T

    # global mean pool via segment-mean selection matrix (static batch)
    num_graphs = len(cur_counts)
    batch_final = np.concatenate(
        [np.full(c, g, np.int32) for g, c in enumerate(cur_counts)]
    )
    sel = (batch_final[None, :] == np.arange(num_graphs)[:, None]).astype(np.float32)
    sel = sel / np.array(cur_counts, np.float32)[:, None]

    (w1, b1), (w2, b2), (w3, b3) = fc_params
    return readout_mlp(jnp.asarray(sel), cur_x, w1, b1, w2, b2, w3, b3)


if __name__ == "__main__":
    key = jax.random.PRNGKey(0)

    in_dim = 8
    hidden_dim = [32, 32, 32]
    num_class = 4
    num_layer = 3
    L = 4
    ratio = 0.5

    # two small graphs: 10 nodes and 6 nodes
    counts = [10, 6]
    N = sum(counts)

    key, kx = jax.random.split(key)
    x = jax.random.normal(kx, (N, in_dim), dtype=jnp.float32)

    # deterministic undirected edges: ring per graph + one chord
    edges, off = [], 0
    for n_g in counts:
        for i in range(n_g):
            j = (i + 1) % n_g
            edges.append((off + i, off + j))
            edges.append((off + j, off + i))
        edges.append((off, off + n_g // 2))
        edges.append((off + n_g // 2, off))
        off += n_g
    edge_index = np.asarray(edges, dtype=np.int32).T      # [2, E] (src, dst)

    # dense adjacency matching SparseTensor(row=edge_index[1], col=edge_index[0])
    adj_np = np.zeros((N, N), np.float32)
    adj_np[edge_index[1], edge_index[0]] = 1.0
    adj = jnp.asarray(adj_np)

    # ---- deterministic parameter init ----
    conv_params, pool_params = [], []
    dims = [in_dim] + hidden_dim
    for i in range(num_layer):
        key, kw, kb = jax.random.split(key, 3)
        bound = 1.0 / math.sqrt(dims[i])
        w_t = jax.random.uniform(kw, (dims[i], dims[i + 1]), jnp.float32, -bound, bound)
        b = jax.random.uniform(kb, (1, dims[i + 1]), jnp.float32, -bound, bound)
        # PANConv filter weights init to 0.5; kernel takes cumulative products
        coef = jnp.cumprod(jnp.full((L + 1,), 0.5, jnp.float32))
        conv_params.append((coef, w_t, b))
        # PANPooling: p filled with 1, beta filled with 0.5
        p_row = jnp.ones((1, dims[i + 1]), jnp.float32)
        beta = jnp.full((2,), 0.5, jnp.float32)
        pool_params.append((p_row, beta))

    H = hidden_dim[-1]
    fc_dims = [H, H // 2, H // 4, num_class]
    fc_params = []
    for i in range(3):
        key, kw, kb = jax.random.split(key, 3)
        bound = 1.0 / math.sqrt(fc_dims[i])
        fc_params.append((
            jax.random.uniform(kw, (fc_dims[i], fc_dims[i + 1]), jnp.float32, -bound, bound),
            jax.random.uniform(kb, (1, fc_dims[i + 1]), jnp.float32, -bound, bound),
        ))

    logits = pan_pool_forward(x, adj, counts, conv_params, pool_params, fc_params, ratio)
    logits = jax.block_until_ready(logits)
    assert logits.shape == (len(counts), num_class)
    print("KERNEL_OK")
</pallas_src>

<mosaic_0001>
module attributes {stable_mosaic.version = 11 : i64} {
  func.func @kernel(%arg0: memref<5xf32, #tpu.memory_space<smem>>, %arg1: memref<2xf32, #tpu.memory_space<smem>>, %arg2: memref<16x16xf32, #tpu.memory_space<vmem>>, %arg3: memref<16x8xf32, #tpu.memory_space<vmem>>, %arg4: memref<8x32xf32, #tpu.memory_space<vmem>>, %arg5: memref<1x32xf32, #tpu.memory_space<vmem>>, %arg6: memref<1x32xf32, #tpu.memory_space<vmem>>, %arg7: memref<16x32xf32, #tpu.memory_space<vmem>>, %arg8: memref<16x1xf32, #tpu.memory_space<vmem>>, %arg9: memref<16x16xf32, #tpu.memory_space<vmem>>) attributes {dimension_semantics = [], scalar_prefetch = 0 : i64, scratch_operands = 0 : i64, tpu.core_type = #tpu.core_type<tc>} {
    %c0 = arith.constant 0 : index
    %c0_0 = arith.constant 0 : index
    %0 = vector.load %arg2[%c0, %c0_0] : memref<16x16xf32, #tpu.memory_space<vmem>>, vector<16x16xf32>
    %1 = arith.truncf %0 : vector<16x16xf32> to vector<16x16xbf16>
    %2 = tpu.iota {dimensions = array<i32: 0>} : vector<16x16xi32>
    %3 = tpu.iota {dimensions = array<i32: 1>} : vector<16x16xi32>
    %4 = arith.cmpi eq, %2, %3 : vector<16x16xi32>
    %5 = arith.extui %4 : vector<16x16xi1> to vector<16x16xi32>
    %6 = arith.sitofp %5 : vector<16x16xi32> to vector<16x16xf32>
    %c0_1 = arith.constant 0 : index
    %7 = memref.load %arg0[%c0_1] : memref<5xf32, #tpu.memory_space<smem>>
    %8 = vector.broadcast %7 : f32 to vector<16x16xf32>
    %9 = arith.mulf %8, %6 : vector<16x16xf32>
    %c1 = arith.constant 1 : index
    %10 = memref.load %arg0[%c1] : memref<5xf32, #tpu.memory_space<smem>>
    %11 = vector.broadcast %10 : f32 to vector<16x16xf32>
    %12 = arith.mulf %11, %0 : vector<16x16xf32>
    %13 = arith.addf %9, %12 : vector<16x16xf32>
    %cst = arith.constant dense<0.000000e+00> : vector<16x16xf32>
    %14 = tpu.matmul %1, %1, %cst {dimension_numbers = #tpu.dot_dimension_numbers<[1], [0], [0], [1], [0, 0, 1, 1], [], []>} : vector<16x16xbf16>, vector<16x16xbf16>, vector<16x16xf32> -> vector<16x16xf32>
    %c2 = arith.constant 2 : index
    %15 = memref.load %arg0[%c2] : memref<5xf32, #tpu.memory_space<smem>>
    %16 = vector.broadcast %15 : f32 to vector<16x16xf32>
    %17 = arith.mulf %16, %14 : vector<16x16xf32>
    %18 = arith.addf %13, %17 : vector<16x16xf32>
    %19 = arith.truncf %14 : vector<16x16xf32> to vector<16x16xbf16>
    %cst_2 = arith.constant dense<0.000000e+00> : vector<16x16xf32>
    %20 = tpu.matmul %19, %1, %cst_2 {dimension_numbers = #tpu.dot_dimension_numbers<[1], [0], [0], [1], [0, 0, 1, 1], [], []>} : vector<16x16xbf16>, vector<16x16xbf16>, vector<16x16xf32> -> vector<16x16xf32>
    %c3 = arith.constant 3 : index
    %21 = memref.load %arg0[%c3] : memref<5xf32, #tpu.memory_space<smem>>
    %22 = vector.broadcast %21 : f32 to vector<16x16xf32>
    %23 = arith.mulf %22, %20 : vector<16x16xf32>
    %24 = arith.addf %18, %23 : vector<16x16xf32>
    %25 = arith.truncf %20 : vector<16x16xf32> to vector<16x16xbf16>
    %cst_3 = arith.constant dense<0.000000e+00> : vector<16x16xf32>
    %26 = tpu.matmul %25, %1, %cst_3 {dimension_numbers = #tpu.dot_dimension_numbers<[1], [0], [0], [1], [0, 0, 1, 1], [], []>} : vector<16x16xbf16>, vector<16x16xbf16>, vector<16x16xf32> -> vector<16x16xf32>
    %c4 = arith.constant 4 : index
    %27 = memref.load %arg0[%c4] : memref<5xf32, #tpu.memory_space<smem>>
    %28 = vector.broadcast %27 : f32 to vector<16x16xf32>
    %29 = arith.mulf %28, %26 : vector<16x16xf32>
    %30 = arith.addf %24, %29 : vector<16x16xf32>
    %cst_4 = arith.constant dense<0.000000e+00> : vector<16xf32>
    %31 = vector.multi_reduction <add>, %30, %cst_4 [1] : vector<16x16xf32> to vector<16xf32>
    %32 = vector.shape_cast %31 : vector<16xf32> to vector<16x1xf32>
    %cst_5 = arith.constant 1.000000e+00 : f32
    %33 = vector.broadcast %cst_5 : f32 to vector<1x16xf32>
    %cst_6 = arith.constant dense<0.000000e+00> : vector<1x16xf32>
    %34 = tpu.matmul %33, %30, %cst_6 {dimension_numbers = #tpu.dot_dimension_numbers<[1], [1], [0], [0], [0, 0, 1, 0], [], []>} : vector<1x16xf32>, vector<16x16xf32>, vector<1x16xf32> -> vector<1x16xf32>
    %cst_7 = arith.constant 0.000000e+00 : f32
    %35 = vector.broadcast %cst_7 : f32 to vector<16x1xf32>
    %36 = arith.cmpf ogt, %32, %35 : vector<16x1xf32>
    %37 = math.rsqrt %32 : vector<16x1xf32>
    %cst_8 = arith.constant 0.000000e+00 : f32
    %38 = vector.broadcast %cst_8 : f32 to vector<16x1xf32>
    %39 = arith.select %36, %37, %38 : vector<16x1xi1>, vector<16x1xf32>
    %cst_9 = arith.constant 0.000000e+00 : f32
    %40 = vector.broadcast %cst_9 : f32 to vector<1x16xf32>
    %41 = arith.cmpf ogt, %34, %40 : vector<1x16xf32>
    %42 = math.rsqrt %34 : vector<1x16xf32>
    %cst_10 = arith.constant 0.000000e+00 : f32
    %43 = vector.broadcast %cst_10 : f32 to vector<1x16xf32>
    %44 = arith.select %41, %42, %43 : vector<1x16xi1>, vector<1x16xf32>
    %45 = vector.broadcast %39 : vector<16x1xf32> to vector<16x16xf32>
    %46 = arith.mulf %45, %30 : vector<16x16xf32>
    %47 = vector.broadcast %44 : vector<1x16xf32> to vector<16x16xf32>
    %48 = arith.mulf %46, %47 : vector<16x16xf32>
    %c0_11 = arith.constant 0 : index
    %c0_12 = arith.constant 0 : index
    %49 = vector.load %arg9[%c0_11, %c0_12] : memref<16x16xf32, #tpu.memory_space<vmem>>, vector<16x16xf32>
    tpu.vector_store %arg9[%c0_11, %c0_12], %48 {strides = array<i32>} : memref<16x16xf32, #tpu.memory_space<vmem>>, vector<16x16xf32>,
    %c0_13 = arith.constant 0 : index
    %c0_14 = arith.constant 0 : index
    %50 = vector.load %arg3[%c0_13, %c0_14] : memref<16x8xf32, #tpu.memory_space<vmem>>, vector<16x8xf32>
    %cst_15 = arith.constant dense<0.000000e+00> : vector<16x8xf32>
    %51 = tpu.matmul %48, %50, %cst_15 {dimension_numbers = #tpu.dot_dimension_numbers<[1], [0], [0], [1], [0, 0, 1, 1], [], []>} : vector<16x16xf32>, vector<16x8xf32>, vector<16x8xf32> -> vector<16x8xf32>
    %c0_16 = arith.constant 0 : index
    %c0_17 = arith.constant 0 : index
    %52 = vector.load %arg4[%c0_16, %c0_17] : memref<8x32xf32, #tpu.memory_space<vmem>>, vector<8x32xf32>
    %cst_18 = arith.constant dense<0.000000e+00> : vector<16x32xf32>
    %53 = tpu.matmul %51, %52, %cst_18 {dimension_numbers = #tpu.dot_dimension_numbers<[1], [0], [0], [1], [0, 0, 1, 1], [], []>} : vector<16x8xf32>, vector<8x32xf32>, vector<16x32xf32> -> vector<16x32xf32>
    %c0_19 = arith.constant 0 : index
    %c0_20 = arith.constant 0 : index
    %54 = vector.load %arg5[%c0_19, %c0_20] : memref<1x32xf32, #tpu.memory_space<vmem>>, vector<1x32xf32>
    %55 = vector.broadcast %54 : vector<1x32xf32> to vector<16x32xf32>
    %56 = arith.addf %53, %55 : vector<16x32xf32>
    %cst_21 = arith.constant 0.000000e+00 : f32
    %57 = vector.broadcast %cst_21 : f32 to vector<16x32xf32>
    %58 = arith.maximumf %56, %57 : vector<16x32xf32>
    %c0_22 = arith.constant 0 : index
    %c0_23 = arith.constant 0 : index
    %59 = vector.load %arg6[%c0_22, %c0_23] : memref<1x32xf32, #tpu.memory_space<vmem>>, vector<1x32xf32>
    %60 = vector.broadcast %59 : vector<1x32xf32> to vector<16x32xf32>
    %61 = arith.mulf %58, %60 : vector<16x32xf32>
    %cst_24 = arith.constant dense<0.000000e+00> : vector<16xf32>
    %62 = vector.multi_reduction <add>, %61, %cst_24 [1] : vector<16x32xf32> to vector<16xf32>
    %63 = vector.shape_cast %62 : vector<16xf32> to vector<16x1xf32>
    %cst_25 = arith.constant 1.000000e+00 : f32
    %64 = vector.broadcast %cst_25 : f32 to vector<16x1xf32>
    %cst_26 = arith.constant dense<0.000000e+00> : vector<16x1xf32>
    %65 = tpu.matmul %48, %64, %cst_26 {dimension_numbers = #tpu.dot_dimension_numbers<[0], [0], [1], [1], [0, 1, 1, 1], [], []>} : vector<16x16xf32>, vector<16x1xf32>, vector<16x1xf32> -> vector<16x1xf32>
    %c0_27 = arith.constant 0 : index
    %66 = memref.load %arg1[%c0_27] : memref<2xf32, #tpu.memory_space<smem>>
    %67 = vector.broadcast %66 : f32 to vector<16x1xf32>
    %68 = arith.mulf %67, %63 : vector<16x1xf32>
    %c1_28 = arith.constant 1 : index
    %69 = memref.load %arg1[%c1_28] : memref<2xf32, #tpu.memory_space<smem>>
    %70 = vector.broadcast %69 : f32 to vector<16x1xf32>
    %71 = arith.mulf %70, %65 : vector<16x1xf32>
    %72 = arith.addf %68, %71 : vector<16x1xf32>
    %73 = math.tanh %72 : vector<16x1xf32>
    %c0_29 = arith.constant 0 : index
    %c0_30 = arith.constant 0 : index
    %74 = vector.load %arg8[%c0_29, %c0_30] : memref<16x1xf32, #tpu.memory_space<vmem>>, vector<16x1xf32>
    tpu.vector_store %arg8[%c0_29, %c0_30], %73 {strides = array<i32>} : memref<16x1xf32, #tpu.memory_space<vmem>>, vector<16x1xf32>,
    %75 = vector.broadcast %73 : vector<16x1xf32> to vector<16x32xf32>
    %76 = arith.mulf %58, %75 : vector<16x32xf32>
    %c0_31 = arith.constant 0 : index
    %c0_32 = arith.constant 0 : index
    %77 = vector.load %arg7[%c0_31, %c0_32] : memref<16x32xf32, #tpu.memory_space<vmem>>, vector<16x32xf32>
    tpu.vector_store %arg7[%c0_31, %c0_32], %76 {strides = array<i32>} : memref<16x32xf32, #tpu.memory_space<vmem>>, vector<16x32xf32>,
    return
  }
}

</mosaic_0001>

<llo_original>
// kernel: tpu_custom_call.1
$region0: #{tpu_custom_call.1}
  #allocation0 [shape = 'u32[]', space=smem, size = 0x4, offset = 0x4, fixed_abs, tag = 'smem constant byte address 0x4 - core index']
  #allocation1 [shape = 'u32[144,128]{1,0:T(1,128)}', space=vmem, size = 0x12000, scoped, tag = 'internal scratch']
  %s0 = inlined_call_operand.vmem [shape: f32[5], index: 0, kind: input, shape index: {}]
  %s1 = inlined_call_operand.vmem [shape: f32[2], index: 1, kind: input, shape index: {}]
  %s2 = inlined_call_operand.vmem [shape: f32[16,16], index: 2, kind: input, shape index: {}]
  %s3 = inlined_call_operand.vmem [shape: f32[16,8], index: 3, kind: input, shape index: {}]
  %s4 = inlined_call_operand.vmem [shape: f32[8,32], index: 4, kind: input, shape index: {}]
  %s5 = inlined_call_operand.vmem [shape: f32[1,32], index: 5, kind: input, shape index: {}]
  %s6 = inlined_call_operand.vmem [shape: f32[1,32], index: 6, kind: input, shape index: {}]
  %s7 = inlined_call_operand.hbm [shape: f32[16,32], index: 7, kind: output, shape index: {0}]
  %s8 = inlined_call_operand.vmem [shape: f32[16,1], index: 8, kind: output, shape index: {1}]
  %s9 = inlined_call_operand.hbm [shape: f32[16,16], index: 9, kind: output, shape index: {2}]
  %10 = xla_tuple %s7, %s8, %s9
  %s11 = sld [smem:[#allocation0]]
  $region62: #{tpu_custom_call.1} parent=0
    _
  %s13 = ssub.s32 1, %s11
  %s14 = scalar_select 0, %s13, %s11
  $region1: #{tpu_custom_call.1} parent=0
    #allocation2 [shape = 'u8[512]{0}', space=smem, size = 0x200, scoped, tag = 'input window, operand 0, single buffered']
    #allocation3 [shape = 's32[1]{0}', space=sflag, size = 0x4, scoped, tag = 'scoped memory for tpu_custom_call.1']
    #allocation4 [shape = 's32[1]{0}', space=sflag, size = 0x4, scoped, tag = 'scoped memory for tpu_custom_call.1']
    #allocation5 [shape = 'u8[512]{0}', space=smem, size = 0x200, scoped, tag = 'input window, operand 1, single buffered']
    #allocation6 [shape = 's32[1]{0}', space=sflag, size = 0x4, scoped, tag = 'scoped memory for tpu_custom_call.1']
    #allocation7 [shape = 'u8[8192]{0}', space=vmem, size = 0x2000, scoped, tag = 'output window, operand 0, single buffered']
    #allocation8 [shape = 'u8[8192]{0}', space=vmem, size = 0x2000, scoped, tag = 'output window, operand 2, single buffered']
    #allocation9 [shape = 's32[1]{0}', space=sflag, size = 0x4, scoped, tag = 'scoped memory for tpu_custom_call.1']
    %15 = vsyncpa [#allocation4], 0
    %16 = vsyncpa [#allocation6], 0
    %17 = vsyncpa [#allocation3], 0
    %18 = vsyncpa [#allocation9], 0
    // Predicated region
    $region2: #{tpu_custom_call.1} parent=1 // pred_check
      _
    $region3: #{tpu_custom_call.1} parent=1 // pred_check_branch
      %20 = sbr.rel (0) target = $region5
    $region4: #{tpu_custom_call.1} parent=1 // pred_region
      %s22 = ssub.s32 16, 16
      %23 = vsyncadd [#allocation4], %s22
      %s25 = sshll.u32 %s0, 4
      %s26 = int_to_ptr.vmem [resolvable:$true] %s25
      %28 = dma.vmem_to_smem %s26, 16, [#allocation2], [#allocation4]
    $region5: #{tpu_custom_call.1} parent=1 // pred_fallthru
      _
    // Predicated region
    $region6: #{tpu_custom_call.1} parent=1 // pred_check
      _
    $region7: #{tpu_custom_call.1} parent=1 // pred_check_branch
      %30 = sbr.rel (0) target = $region9
    $region8: #{tpu_custom_call.1} parent=1 // pred_region
      %s32 = ssub.s32 16, 16
      %33 = vsyncadd [#allocation6], %s32
      %s35 = sshll.u32 %s1, 4
      %s36 = int_to_ptr.vmem [resolvable:$true] %s35
      %38 = dma.vmem_to_smem %s36, 16, [#allocation5], [#allocation6]
    $region9: #{tpu_custom_call.1} parent=1 // pred_fallthru
      _
    // Predicated region
    $region10: #{tpu_custom_call.1} parent=1 // pred_check
      _
    $region11: #{tpu_custom_call.1} parent=1 // pred_check_branch
      %40 = sbr.rel (0) target = $region13
    $region12: #{tpu_custom_call.1} parent=1 // pred_region
      _
    $region13: #{tpu_custom_call.1} parent=1 // pred_fallthru
      _
    // Predicated region
    $region14: #{tpu_custom_call.1} parent=1 // pred_check
      _
    $region15: #{tpu_custom_call.1} parent=1 // pred_check_branch
      %42 = sbr.rel (0) target = $region17
    $region16: #{tpu_custom_call.1} parent=1 // pred_region
      _
    $region17: #{tpu_custom_call.1} parent=1 // pred_fallthru
      _
    // Predicated region
    $region18: #{tpu_custom_call.1} parent=1 // pred_check
      _
    $region19: #{tpu_custom_call.1} parent=1 // pred_check_branch
      %44 = sbr.rel (0) target = $region21
    $region20: #{tpu_custom_call.1} parent=1 // pred_region
      _
    $region21: #{tpu_custom_call.1} parent=1 // pred_fallthru
      _
    // Predicated region
    $region22: #{tpu_custom_call.1} parent=1 // pred_check
      _
    $region23: #{tpu_custom_call.1} parent=1 // pred_check_branch
      %46 = sbr.rel (0) target = $region25
    $region24: #{tpu_custom_call.1} parent=1 // pred_region
      _
    $region25: #{tpu_custom_call.1} parent=1 // pred_fallthru
      _
    // Predicated region
    $region26: #{tpu_custom_call.1} parent=1 // pred_check
      _
    $region27: #{tpu_custom_call.1} parent=1 // pred_check_branch
      %48 = sbr.rel (0) target = $region29
    $region28: #{tpu_custom_call.1} parent=1 // pred_region
      _
    $region29: #{tpu_custom_call.1} parent=1 // pred_fallthru
      _
    // Predicated region
    $region30: #{tpu_custom_call.1} parent=1 // pred_check
      _
    $region31: #{tpu_custom_call.1} parent=1 // pred_check_branch
      %50 = sbr.rel (0) target = $region33
    $region32: #{tpu_custom_call.1} parent=1 // pred_region
      %51 = dma.done [#allocation4], 16
    $region33: #{tpu_custom_call.1} parent=1 // pred_fallthru
      _
    // Predicated region
    $region34: #{tpu_custom_call.1} parent=1 // pred_check
      _
    $region35: #{tpu_custom_call.1} parent=1 // pred_check_branch
      %53 = sbr.rel (0) target = $region37
    $region36: #{tpu_custom_call.1} parent=1 // pred_region
      %54 = dma.done [#allocation6], 16
    $region37: #{tpu_custom_call.1} parent=1 // pred_fallthru
      _
    %55 = sfence
    %v57 = vld [vmem:[%s2] sm:$0xff]
    %v58 = vld [vmem:[%s2 + $0x8] sm:$0xff]
    %v59 = vpack.c.bf16 %v58, %v57
    %v60 = vlaneseq
    %v61 = vshrl.u32 %v60, 7
    %v62 = vadd.s32 %v61, 8
    %v63 = vlaneseq
    %v64 = vand.u32 %v63, 127
    %vm65 = vcmp.eq.s32.totalorder %v61, %v64
    %vm66 = vcmp.eq.s32.totalorder %v62, %v64
    %v67 = vsel %vm65, 1, 0
    %v68 = vsel %vm66, 1, 0
    %v69 = vcvt.s32.f32 %v67
    %v70 = vcvt.s32.f32 %v68
    %s71 = sld [smem:[#allocation2]]
    %v72 = vstv %s71
    %v73 = vmul.f32 %v72, %v69
    %v74 = vmul.f32 %v72, %v70
    %s75 = sld [smem:[#allocation2 + $0x1]]
    %v76 = vstv %s75
    %v77 = vmul.f32 %v76, %v57
    %v78 = vmul.f32 %v76, %v58
    %v79 = vadd.f32 %v73, %v77
    %v80 = vadd.f32 %v74, %v78
    %vm81 = vcmask 130048
    %v83 = vsel %vm81, %v59, 0
    %85 = vmatprep.subr.bf16.mxu0 0
    %86 = vmatpush1.bf16.msra.mxu0 %v59
    %87 = vmatprep.subr.bf16.mxu0 0
    %88 = vmatpush1.bf16.msra.mxu0 0
    %89 = vmatprep.subr.bf16.mxu0 0
    %90 = vmatpush1.bf16.msra.mxu0 0
    %91 = vmatprep.subr.bf16.mxu0 0
    %92 = vmatpush1.bf16.msra.mxu0 0
    %93 = vmatprep.subr.bf16.mxu0 0
    %94 = vmatpush1.bf16.msra.mxu0 0
    %95 = vmatprep.subr.bf16.mxu0 0
    %96 = vmatpush1.bf16.msra.mxu0 0
    %97 = vmatprep.subr.bf16.mxu0 0
    %98 = vmatpush1.bf16.msra.mxu0 0
    %99 = vmatprep.subr.bf16.mxu0 0
    %100 = vmatpush1.bf16.msra.mxu0 0
    %101 = vmatprep.subr.bf16.mxu0 0
    %102 = vmatpush1.bf16.msra.mxu0 0
    %103 = vmatprep.subr.bf16.mxu0 0
    %104 = vmatpush1.bf16.msra.mxu0 0
    %105 = vmatprep.subr.bf16.mxu0 0
    %106 = vmatpush1.bf16.msra.mxu0 0
    %107 = vmatprep.subr.bf16.mxu0 0
    %108 = vmatpush1.bf16.msra.mxu0 0
    %109 = vmatprep.subr.bf16.mxu0 0
    %110 = vmatpush1.bf16.msra.mxu0 0
    %111 = vmatprep.subr.bf16.mxu0 0
    %112 = vmatpush1.bf16.msra.mxu0 0
    %113 = vmatprep.subr.bf16.mxu0 0
    %114 = vmatpush1.bf16.msra.mxu0 0
    %115 = vmatprep.subr.bf16.mxu0 0
    %116 = vmatpush1.bf16.msra.mxu0 0
    %117 = vmatprep.mubr.bf16.mxu0 0
    %118 = vmatmul.mubr.bf16.gmra.mrb[0].mxu0 %v83
    %v119 = vpop.f32.mrb[0].mxu0
    %v120 = vadd.f32 0.0, %v119
    %v121 = vpop.f32.mrb[0].mxu0
    %v122 = vpop.f32.mrb[0].mxu0
    %v123 = vadd.f32 0.0, %v122
    %v124 = vpop.f32.mrb[0].mxu0
    %125 = vdwg.mxu0
    %s126 = sld [smem:[#allocation2 + $0x2]]
    %v127 = vstv %s126
    %v128 = vmul.f32 %v127, %v120
    %v129 = vmul.f32 %v127, %v123
    %v130 = vadd.f32 %v79, %v128
    %v131 = vadd.f32 %v80, %v129
    %v132 = vpack.c.bf16 %v123, %v120
    %v134 = vsel %vm81, %v132, 0
    %136 = vmatprep.subr.bf16.mxu0 0
    %137 = vmatpush1.bf16.msra.mxu0 %v59
    %138 = vmatprep.subr.bf16.mxu0 0
    %139 = vmatpush1.bf16.msra.mxu0 0
    %140 = vmatprep.subr.bf16.mxu0 0
    %141 = vmatpush1.bf16.msra.mxu0 0
    %142 = vmatprep.subr.bf16.mxu0 0
    %143 = vmatpush1.bf16.msra.mxu0 0
    %144 = vmatprep.subr.bf16.mxu0 0
    %145 = vmatpush1.bf16.msra.mxu0 0
    %146 = vmatprep.subr.bf16.mxu0 0
    %147 = vmatpush1.bf16.msra.mxu0 0
    %148 = vmatprep.subr.bf16.mxu0 0
    %149 = vmatpush1.bf16.msra.mxu0 0
    %150 = vmatprep.subr.bf16.mxu0 0
    %151 = vmatpush1.bf16.msra.mxu0 0
    %152 = vmatprep.subr.bf16.mxu0 0
    %153 = vmatpush1.bf16.msra.mxu0 0
    %154 = vmatprep.subr.bf16.mxu0 0
    %155 = vmatpush1.bf16.msra.mxu0 0
    %156 = vmatprep.subr.bf16.mxu0 0
    %157 = vmatpush1.bf16.msra.mxu0 0
    %158 = vmatprep.subr.bf16.mxu0 0
    %159 = vmatpush1.bf16.msra.mxu0 0
    %160 = vmatprep.subr.bf16.mxu0 0
    %161 = vmatpush1.bf16.msra.mxu0 0
    %162 = vmatprep.subr.bf16.mxu0 0
    %163 = vmatpush1.bf16.msra.mxu0 0
    %164 = vmatprep.subr.bf16.mxu0 0
    %165 = vmatpush1.bf16.msra.mxu0 0
    %166 = vmatprep.subr.bf16.mxu0 0
    %167 = vmatpush1.bf16.msra.mxu0 0
    %168 = vmatprep.mubr.bf16.mxu0 0
    %169 = vmatmul.mubr.bf16.gmra.mrb[0].mxu0 %v134
    %v170 = vpop.f32.mrb[0].mxu0
    %v171 = vadd.f32 0.0, %v170
    %v172 = vpop.f32.mrb[0].mxu0
    %v173 = vpop.f32.mrb[0].mxu0
    %v174 = vadd.f32 0.0, %v173
    %v175 = vpop.f32.mrb[0].mxu0
    %176 = vdwg.mxu0
    %s177 = sld [smem:[#allocation2 + $0x3]]
    %v178 = vstv %s177
    %v179 = vmul.f32 %v178, %v171
    %v180 = vmul.f32 %v178, %v174
    %v181 = vadd.f32 %v130, %v179
    %v182 = vadd.f32 %v131, %v180
    %v183 = vpack.c.bf16 %v174, %v171
    %v185 = vsel %vm81, %v183, 0
    %187 = vmatprep.subr.bf16.mxu0 0
    %188 = vmatpush1.bf16.msra.mxu0 %v59
    %189 = vmatprep.subr.bf16.mxu0 0
    %190 = vmatpush1.bf16.msra.mxu0 0
    %191 = vmatprep.subr.bf16.mxu0 0
    %192 = vmatpush1.bf16.msra.mxu0 0
    %193 = vmatprep.subr.bf16.mxu0 0
    %194 = vmatpush1.bf16.msra.mxu0 0
    %195 = vmatprep.subr.bf16.mxu0 0
    %196 = vmatpush1.bf16.msra.mxu0 0
    %197 = vmatprep.subr.bf16.mxu0 0
    %198 = vmatpush1.bf16.msra.mxu0 0
    %199 = vmatprep.subr.bf16.mxu0 0
    %200 = vmatpush1.bf16.msra.mxu0 0
    %201 = vmatprep.subr.bf16.mxu0 0
    %202 = vmatpush1.bf16.msra.mxu0 0
    %203 = vmatprep.subr.bf16.mxu0 0
    %204 = vmatpush1.bf16.msra.mxu0 0
    %205 = vmatprep.subr.bf16.mxu0 0
    %206 = vmatpush1.bf16.msra.mxu0 0
    %207 = vmatprep.subr.bf16.mxu0 0
    %208 = vmatpush1.bf16.msra.mxu0 0
    %209 = vmatprep.subr.bf16.mxu0 0
    %210 = vmatpush1.bf16.msra.mxu0 0
    %211 = vmatprep.subr.bf16.mxu0 0
    %212 = vmatpush1.bf16.msra.mxu0 0
    %213 = vmatprep.subr.bf16.mxu0 0
    %214 = vmatpush1.bf16.msra.mxu0 0
    %215 = vmatprep.subr.bf16.mxu0 0
    %216 = vmatpush1.bf16.msra.mxu0 0
    %217 = vmatprep.subr.bf16.mxu0 0
    %218 = vmatpush1.bf16.msra.mxu0 0
    %219 = vmatprep.mubr.bf16.mxu0 0
    %220 = vmatmul.mubr.bf16.gmra.mrb[0].mxu0 %v185
    %v221 = vpop.f32.mrb[0].mxu0
    %v222 = vadd.f32 0.0, %v221
    %v223 = vpop.f32.mrb[0].mxu0
    %v224 = vpop.f32.mrb[0].mxu0
    %v225 = vadd.f32 0.0, %v224
    %v226 = vpop.f32.mrb[0].mxu0
    %227 = vdwg.mxu0
    %s228 = sld [smem:[#allocation2 + $0x4]]
    %v229 = vstv %s228
    %v230 = vmul.f32 %v229, %v222
    %v231 = vmul.f32 %v229, %v225
    %v232 = vadd.f32 %v181, %v230
    %v233 = vadd.f32 %v182, %v231
    %v234 = vsel %vm81, %v232, 0.0
    %235 = vadd.xlane.f32.xlu0 %v234
    %v236 = vpop.xlane.xlu0 %235
    %v237 = vsel %vm81, %v233, 0.0
    %238 = vadd.xlane.f32.xlu0 %v237
    %v239 = vpop.xlane.xlu0 %238
    %v241 = vsel %vm81, 1.0, 0
    %v244 = vsel %vm81, %v232, 0
    %v247 = vsel %vm81, %v233, 0
    %249 = vmatprep.subr.mxu0 0.0
    %250 = vmatpush1.xpose.msra.mxu0 %v244
    %251 = vmatprep.subr.mxu0 0.0
    %252 = vmatpush1.xpose.msra.mxu0 %v247
    %253 = vmatprep.subr.mxu0 0.0
    %254 = vmatpush1.xpose.msra.mxu0 0.0
    %255 = vmatprep.subr.mxu0 0.0
    %256 = vmatpush1.xpose.msra.mxu0 0.0
    %257 = vmatprep.subr.mxu0 0.0
    %258 = vmatpush1.xpose.msra.mxu0 0.0
    %259 = vmatprep.subr.mxu0 0.0
    %260 = vmatpush1.xpose.msra.mxu0 0.0
    %261 = vmatprep.subr.mxu0 0.0
    %262 = vmatpush1.xpose.msra.mxu0 0.0
    %263 = vmatprep.subr.mxu0 0.0
    %264 = vmatpush1.xpose.msra.mxu0 0.0
    %265 = vmatprep.subr.mxu0 0.0
    %266 = vmatpush1.xpose.msra.mxu0 0.0
    %267 = vmatprep.subr.mxu0 0.0
    %268 = vmatpush1.xpose.msra.mxu0 0.0
    %269 = vmatprep.subr.mxu0 0.0
    %270 = vmatpush1.xpose.msra.mxu0 0.0
    %271 = vmatprep.subr.mxu0 0.0
    %272 = vmatpush1.xpose.msra.mxu0 0.0
    %273 = vmatprep.subr.mxu0 0.0
    %274 = vmatpush1.xpose.msra.mxu0 0.0
    %275 = vmatprep.subr.mxu0 0.0
    %276 = vmatpush1.xpose.msra.mxu0 0.0
    %277 = vmatprep.subr.mxu0 0.0
    %278 = vmatpush1.xpose.msra.mxu0 0.0
    %279 = vmatprep.subr.mxu0 0.0
    %280 = vmatpush1.xpose.msra.mxu0 0.0
    %281 = vmatprep.subr.mxu0 0.0
    %282 = vmatpush1.xpose.msra.mxu0 0.0
    %283 = vmatprep.subr.mxu0 0.0
    %284 = vmatpush1.xpose.msra.mxu0 0.0
    %285 = vmatprep.subr.mxu0 0.0
    %286 = vmatpush1.xpose.msra.mxu0 0.0
    %287 = vmatprep.subr.mxu0 0.0
    %288 = vmatpush1.xpose.msra.mxu0 0.0
    %289 = vmatprep.subr.mxu0 0.0
    %290 = vmatpush1.xpose.msra.mxu0 0.0
    %291 = vmatprep.subr.mxu0 0.0
    %292 = vmatpush1.xpose.msra.mxu0 0.0
    %293 = vmatprep.subr.mxu0 0.0
    %294 = vmatpush1.xpose.msra.mxu0 0.0
    %295 = vmatprep.subr.mxu0 0.0
    %296 = vmatpush1.xpose.msra.mxu0 0.0
    %297 = vmatprep.subr.mxu0 0.0
    %298 = vmatpush1.xpose.msra.mxu0 0.0
    %299 = vmatprep.subr.mxu0 0.0
    %300 = vmatpush1.xpose.msra.mxu0 0.0
    %301 = vmatprep.subr.mxu0 0.0
    %302 = vmatpush1.xpose.msra.mxu0 0.0
    %303 = vmatprep.subr.mxu0 0.0
    %304 = vmatpush1.xpose.msra.mxu0 0.0
    %305 = vmatprep.subr.mxu0 0.0
    %306 = vmatpush1.xpose.msra.mxu0 0.0
    %307 = vmatprep.subr.mxu0 0.0
    %308 = vmatpush1.xpose.msra.mxu0 0.0
    %309 = vmatprep.subr.mxu0 0.0
    %310 = vmatpush1.xpose.msra.mxu0 0.0
    %311 = vmatprep.subr.mxu0 0.0
    %312 = vmatpush1.xpose.msra.mxu0 0.0
    %313 = vmatprep.mubr.f32.mxu0 0.0
    %314 = vmatmul.mubr.f32.gmra.mrb[0].mxu0 %v241
    %v315 = vpop.f32.mrb[0].mxu0
    %v316 = vadd.f32 0.0, %v315
    %v317 = vpop.f32.mrb[0].mxu0
    %318 = vdwg.mxu0
    %vm319 = vcmp.gt.f32.partialorder %v236, 0.0
    %vm320 = vcmp.gt.f32.partialorder %v239, 0.0
    %v321 = vrsqrt.pop %v236
    %v322 = vrsqrt.pop %v239
    %v323 = vsel %vm319, %v321, 0.0
    %v324 = vsel %vm320, %v322, 0.0
    %vm325 = vcmp.gt.f32.partialorder %v316, 0.0
    %v326 = vrsqrt.pop %v316
    %v327 = vsel %vm325, %v326, 0.0
    %v328 = vmul.f32 %v323, %v232
    %v329 = vmul.f32 %v324, %v233
    %v330 = vlaneseq
    %v331 = vshrl.u32 %v330, 7
    %v332 = vsub.s32 0, %v331
    %v333 = vrot.slane %v327, %v332
    %v334 = vmul.f32 %v328, %v333
    %v335 = vmul.f32 %v329, %v333
    %336 = vst.msk [vmem:[#allocation8] sm:$0xff] %vm81, %v334
    %337 = vst.msk [vmem:[#allocation8 + $0x8] sm:$0xff] %vm81, %v335
    %v338 = vld [vmem:[%s3] sm:$0xff]
    %v339 = vld [vmem:[%s3 + $0x8] sm:$0xff]
    %v341 = vsel %vm81, %v334, 0
    %v344 = vsel %vm81, %v335, 0
    %346 = vmatprep.subr.mxu0 0.0
    %347 = vmatpush1.msra.mxu0 %v338
    %348 = vmatprep.subr.mxu0 0.0
    %349 = vmatpush1.msra.mxu0 %v339
    %350 = vmatprep.subr.mxu0 0.0
    %351 = vmatpush1.msra.mxu0 0.0
    %352 = vmatprep.subr.mxu0 0.0
    %353 = vmatpush1.msra.mxu0 0.0
    %354 = vmatprep.subr.mxu0 0.0
    %355 = vmatpush1.msra.mxu0 0.0
    %356 = vmatprep.subr.mxu0 0.0
    %357 = vmatpush1.msra.mxu0 0.0
    %358 = vmatprep.subr.mxu0 0.0
    %359 = vmatpush1.msra.mxu0 0.0
    %360 = vmatprep.subr.mxu0 0.0
    %361 = vmatpush1.msra.mxu0 0.0
    %362 = vmatprep.subr.mxu0 0.0
    %363 = vmatpush1.msra.mxu0 0.0
    %364 = vmatprep.subr.mxu0 0.0
    %365 = vmatpush1.msra.mxu0 0.0
    %366 = vmatprep.subr.mxu0 0.0
    %367 = vmatpush1.msra.mxu0 0.0
    %368 = vmatprep.subr.mxu0 0.0
    %369 = vmatpush1.msra.mxu0 0.0
    %370 = vmatprep.subr.mxu0 0.0
    %371 = vmatpush1.msra.mxu0 0.0
    %372 = vmatprep.subr.mxu0 0.0
    %373 = vmatpush1.msra.mxu0 0.0
    %374 = vmatprep.subr.mxu0 0.0
    %375 = vmatpush1.msra.mxu0 0.0
    %376 = vmatprep.subr.mxu0 0.0
    %377 = vmatpush1.msra.mxu0 0.0
    %378 = vmatprep.subr.mxu0 0.0
    %379 = vmatpush1.msra.mxu0 0.0
    %380 = vmatprep.subr.mxu0 0.0
    %381 = vmatpush1.msra.mxu0 0.0
    %382 = vmatprep.subr.mxu0 0.0
    %383 = vmatpush1.msra.mxu0 0.0
    %384 = vmatprep.subr.mxu0 0.0
    %385 = vmatpush1.msra.mxu0 0.0
    %386 = vmatprep.subr.mxu0 0.0
    %387 = vmatpush1.msra.mxu0 0.0
    %388 = vmatprep.subr.mxu0 0.0
    %389 = vmatpush1.msra.mxu0 0.0
    %390 = vmatprep.subr.mxu0 0.0
    %391 = vmatpush1.msra.mxu0 0.0
    %392 = vmatprep.subr.mxu0 0.0
    %393 = vmatpush1.msra.mxu0 0.0
    %394 = vmatprep.subr.mxu0 0.0
    %395 = vmatpush1.msra.mxu0 0.0
    %396 = vmatprep.subr.mxu0 0.0
    %397 = vmatpush1.msra.mxu0 0.0
    %398 = vmatprep.subr.mxu0 0.0
    %399 = vmatpush1.msra.mxu0 0.0
    %400 = vmatprep.subr.mxu0 0.0
    %401 = vmatpush1.msra.mxu0 0.0
    %402 = vmatprep.subr.mxu0 0.0
    %403 = vmatpush1.msra.mxu0 0.0
    %404 = vmatprep.subr.mxu0 0.0
    %405 = vmatpush1.msra.mxu0 0.0
    %406 = vmatprep.subr.mxu0 0.0
    %407 = vmatpush1.msra.mxu0 0.0
    %408 = vmatprep.subr.mxu0 0.0
    %409 = vmatpush1.msra.mxu0 0.0
    %410 = vmatprep.mubr.f32.mxu0 0.0
    %411 = vmatmul.mubr.f32.gmra.mrb[0].mxu0 %v341
    %v412 = vpop.f32.mrb[0].mxu0
    %v413 = vadd.f32 0.0, %v412
    %v414 = vpop.f32.mrb[0].mxu0
    %415 = vmatprep.mubr.f32.mxu0 0.0
    %416 = vmatmul.mubr.f32.gmra.mrb[0].mxu0 %v344
    %v417 = vpop.f32.mrb[0].mxu0
    %v418 = vadd.f32 0.0, %v417
    %v419 = vpop.f32.mrb[0].mxu0
    %420 = vdwg.mxu0
    %v421 = vld [vmem:[%s4] sm:$0xff]
    %v422 = vld [vmem:[%s5] sm:$0x1]
    %v424 = vlaneseq
    %v425 = vshrl.u32 %v424, 7
    %v426 = vsub.s32 0, %v425
    %v427 = vrot.slane %v422, %v426
    %vm429 = vcmask 64512
    %v431 = vsel %vm429, %v413, 0
    %v434 = vsel %vm429, %v418, 0
    %436 = vmatprep.subr.mxu0 0.0
    %437 = vmatpush1.msra.mxu0 %v421
    %438 = vmatprep.subr.mxu0 0.0
    %439 = vmatpush1.msra.mxu0 0.0
    %440 = vmatprep.subr.mxu0 0.0
    %441 = vmatpush1.msra.mxu0 0.0
    %442 = vmatprep.subr.mxu0 0.0
    %443 = vmatpush1.msra.mxu0 0.0
    %444 = vmatprep.subr.mxu0 0.0
    %445 = vmatpush1.msra.mxu0 0.0
    %446 = vmatprep.subr.mxu0 0.0
    %447 = vmatpush1.msra.mxu0 0.0
    %448 = vmatprep.subr.mxu0 0.0
    %449 = vmatpush1.msra.mxu0 0.0
    %450 = vmatprep.subr.mxu0 0.0
    %451 = vmatpush1.msra.mxu0 0.0
    %452 = vmatprep.subr.mxu0 0.0
    %453 = vmatpush1.msra.mxu0 0.0
    %454 = vmatprep.subr.mxu0 0.0
    %455 = vmatpush1.msra.mxu0 0.0
    %456 = vmatprep.subr.mxu0 0.0
    %457 = vmatpush1.msra.mxu0 0.0
    %458 = vmatprep.subr.mxu0 0.0
    %459 = vmatpush1.msra.mxu0 0.0
    %460 = vmatprep.subr.mxu0 0.0
    %461 = vmatpush1.msra.mxu0 0.0
    %462 = vmatprep.subr.mxu0 0.0
    %463 = vmatpush1.msra.mxu0 0.0
    %464 = vmatprep.subr.mxu0 0.0
    %465 = vmatpush1.msra.mxu0 0.0
    %466 = vmatprep.subr.mxu0 0.0
    %467 = vmatpush1.msra.mxu0 0.0
    %468 = vmatprep.subr.mxu0 0.0
    %469 = vmatpush1.msra.mxu0 0.0
    %470 = vmatprep.subr.mxu0 0.0
    %471 = vmatpush1.msra.mxu0 0.0
    %472 = vmatprep.subr.mxu0 0.0
    %473 = vmatpush1.msra.mxu0 0.0
    %474 = vmatprep.subr.mxu0 0.0
    %475 = vmatpush1.msra.mxu0 0.0
    %476 = vmatprep.subr.mxu0 0.0
    %477 = vmatpush1.msra.mxu0 0.0
    %478 = vmatprep.subr.mxu0 0.0
    %479 = vmatpush1.msra.mxu0 0.0
    %480 = vmatprep.subr.mxu0 0.0
    %481 = vmatpush1.msra.mxu0 0.0
    %482 = vmatprep.subr.mxu0 0.0
    %483 = vmatpush1.msra.mxu0 0.0
    %484 = vmatprep.subr.mxu0 0.0
    %485 = vmatpush1.msra.mxu0 0.0
    %486 = vmatprep.subr.mxu0 0.0
    %487 = vmatpush1.msra.mxu0 0.0
    %488 = vmatprep.subr.mxu0 0.0
    %489 = vmatpush1.msra.mxu0 0.0
    %490 = vmatprep.subr.mxu0 0.0
    %491 = vmatpush1.msra.mxu0 0.0
    %492 = vmatprep.subr.mxu0 0.0
    %493 = vmatpush1.msra.mxu0 0.0
    %494 = vmatprep.subr.mxu0 0.0
    %495 = vmatpush1.msra.mxu0 0.0
    %496 = vmatprep.subr.mxu0 0.0
    %497 = vmatpush1.msra.mxu0 0.0
    %498 = vmatprep.subr.mxu0 0.0
    %499 = vmatpush1.msra.mxu0 0.0
    %500 = vmatprep.mubr.f32.mxu0 0.0
    %501 = vmatmul.mubr.f32.gmra.mrb[0].mxu0 %v431
    %v502 = vpop.f32.mrb[0].mxu0
    %v503 = vadd.f32 %v427, %v502
    %v504 = vpop.f32.mrb[0].mxu0
    %505 = vmatprep.mubr.f32.mxu0 0.0
    %506 = vmatmul.mubr.f32.gmra.mrb[0].mxu0 %v434
    %v507 = vpop.f32.mrb[0].mxu0
    %v508 = vadd.f32 %v427, %v507
    %v509 = vpop.f32.mrb[0].mxu0
    %510 = vdwg.mxu0
    %v511 = vmax.f32 %v503, 0.0
    %v512 = vmax.f32 %v508, 0.0
    %v513 = vld [vmem:[%s6] sm:$0x1]
    %v515 = vlaneseq
    %v516 = vshrl.u32 %v515, 7
    %v517 = vsub.s32 0, %v516
    %v518 = vrot.slane %v513, %v517
    %v520 = vmul.f32 %v511, %v518
    %v521 = vmul.f32 %v512, %v518
    %vm522 = vcmask 261120
    %v523 = vsel %vm522, %v520, 0.0
    %524 = vadd.xlane.f32.xlu0 %v523
    %v525 = vpop.xlane.xlu0 %524
    %v526 = vsel %vm522, %v521, 0.0
    %527 = vadd.xlane.f32.xlu0 %v526
    %v528 = vpop.xlane.xlu0 %527
    %529 = vxpose.xlu0.b32.start [1/16] %v334, 128
    %530 = vxpose.xlu0.b32.cont [2/16] %v335, 128
    %531 = vxpose.xlu0.b32.cont [3/16] 0.0, 128
    %532 = vxpose.xlu0.b32.cont [4/16] 0.0, 128
    %533 = vxpose.xlu0.b32.cont [5/16] 0.0, 128
    %534 = vxpose.xlu0.b32.cont [6/16] 0.0, 128
    %535 = vxpose.xlu0.b32.cont [7/16] 0.0, 128
    %536 = vxpose.xlu0.b32.cont [8/16] 0.0, 128
    %537 = vxpose.xlu0.b32.cont [9/16] 0.0, 128
    %538 = vxpose.xlu0.b32.cont [10/16] 0.0, 128
    %539 = vxpose.xlu0.b32.cont [11/16] 0.0, 128
    %540 = vxpose.xlu0.b32.cont [12/16] 0.0, 128
    %541 = vxpose.xlu0.b32.cont [13/16] 0.0, 128
    %542 = vxpose.xlu0.b32.cont [14/16] 0.0, 128
    %543 = vxpose.xlu0.b32.cont [15/16] 0.0, 128
    %544 = vxpose.xlu0.b32.end [16/16] 0.0, 128
    %v545 = vpop.trf.xlu0
    %v546 = vpop.trf.xlu0
    %v547 = vpop.trf.xlu0
    %v548 = vpop.trf.xlu0
    %v549 = vpop.trf.xlu0
    %v550 = vpop.trf.xlu0
    %v551 = vpop.trf.xlu0
    %v552 = vpop.trf.xlu0
    %v553 = vpop.trf.xlu0
    %v554 = vpop.trf.xlu0
    %v555 = vpop.trf.xlu0
    %v556 = vpop.trf.xlu0
    %v557 = vpop.trf.xlu0
    %v558 = vpop.trf.xlu0
    %v559 = vpop.trf.xlu0
    %v560 = vpop.trf.xlu0
    %v562 = vsel %vm81, %v545, 0
    %v565 = vsel %vm81, %v546, 0
    %567 = vmatprep.subr.mxu0 0.0
    %568 = vmatpush1.msra.mxu0 1.0
    %569 = vmatprep.subr.mxu0 0.0
    %570 = vmatpush1.msra.mxu0 1.0
    %571 = vmatprep.subr.mxu0 0.0
    %572 = vmatpush1.msra.mxu0 0.0
    %573 = vmatprep.subr.mxu0 0.0
    %574 = vmatpush1.msra.mxu0 0.0
    %575 = vmatprep.subr.mxu0 0.0
    %576 = vmatpush1.msra.mxu0 0.0
    %577 = vmatprep.subr.mxu0 0.0
    %578 = vmatpush1.msra.mxu0 0.0
    %579 = vmatprep.subr.mxu0 0.0
    %580 = vmatpush1.msra.mxu0 0.0
    %581 = vmatprep.subr.mxu0 0.0
    %582 = vmatpush1.msra.mxu0 0.0
    %583 = vmatprep.subr.mxu0 0.0
    %584 = vmatpush1.msra.mxu0 0.0
    %585 = vmatprep.subr.mxu0 0.0
    %586 = vmatpush1.msra.mxu0 0.0
    %587 = vmatprep.subr.mxu0 0.0
    %588 = vmatpush1.msra.mxu0 0.0
    %589 = vmatprep.subr.mxu0 0.0
    %590 = vmatpush1.msra.mxu0 0.0
    %591 = vmatprep.subr.mxu0 0.0
    %592 = vmatpush1.msra.mxu0 0.0
    %593 = vmatprep.subr.mxu0 0.0
    %594 = vmatpush1.msra.mxu0 0.0
    %595 = vmatprep.subr.mxu0 0.0
    %596 = vmatpush1.msra.mxu0 0.0
    %597 = vmatprep.subr.mxu0 0.0
    %598 = vmatpush1.msra.mxu0 0.0
    %599 = vmatprep.subr.mxu0 0.0
    %600 = vmatpush1.msra.mxu0 0.0
    %601 = vmatprep.subr.mxu0 0.0
    %602 = vmatpush1.msra.mxu0 0.0
    %603 = vmatprep.subr.mxu0 0.0
    %604 = vmatpush1.msra.mxu0 0.0
    %605 = vmatprep.subr.mxu0 0.0
    %606 = vmatpush1.msra.mxu0 0.0
    %607 = vmatprep.subr.mxu0 0.0
    %608 = vmatpush1.msra.mxu0 0.0
    %609 = vmatprep.subr.mxu0 0.0
    %610 = vmatpush1.msra.mxu0 0.0
    %611 = vmatprep.subr.mxu0 0.0
    %612 = vmatpush1.msra.mxu0 0.0
    %613 = vmatprep.subr.mxu0 0.0
    %614 = vmatpush1.msra.mxu0 0.0
    %615 = vmatprep.subr.mxu0 0.0
    %616 = vmatpush1.msra.mxu0 0.0
    %617 = vmatprep.subr.mxu0 0.0
    %618 = vmatpush1.msra.mxu0 0.0
    %619 = vmatprep.subr.mxu0 0.0
    %620 = vmatpush1.msra.mxu0 0.0
    %621 = vmatprep.subr.mxu0 0.0
    %622 = vmatpush1.msra.mxu0 0.0
    %623 = vmatprep.subr.mxu0 0.0
    %624 = vmatpush1.msra.mxu0 0.0
    %625 = vmatprep.subr.mxu0 0.0
    %626 = vmatpush1.msra.mxu0 0.0
    %627 = vmatprep.subr.mxu0 0.0
    %628 = vmatpush1.msra.mxu0 0.0
    %629 = vmatprep.subr.mxu0 0.0
    %630 = vmatpush1.msra.mxu0 0.0
    %631 = vmatprep.mubr.f32.mxu0 0.0
    %632 = vmatmul.mubr.f32.gmra.mrb[0].mxu0 %v562
    %v633 = vpop.f32.mrb[0].mxu0
    %v634 = vadd.f32 0.0, %v633
    %v635 = vpop.f32.mrb[0].mxu0
    %636 = vmatprep.mubr.f32.mxu0 0.0
    %637 = vmatmul.mubr.f32.gmra.mrb[0].mxu0 %v565
    %v638 = vpop.f32.mrb[0].mxu0
    %v639 = vadd.f32 0.0, %v638
    %v640 = vpop.f32.mrb[0].mxu0
    %641 = vdwg.mxu0
    %s642 = sld [smem:[#allocation5]]
    %v643 = vstv %s642
    %v644 = vmul.f32 %v643, %v525
    %v645 = vmul.f32 %v643, %v528
    %s646 = sld [smem:[#allocation5 + $0x1]]
    %v647 = vstv %s646
    %v648 = vmul.f32 %v647, %v634
    %v649 = vmul.f32 %v647, %v639
    %v650 = vadd.f32 %v644, %v648
    %v651 = vadd.f32 %v645, %v649
    %v652 = vtanh.pop %v650
    %v653 = vtanh.pop %v651
    %vm654 = vcmask 7168
    %655 = vst.msk [vmem:[%s8] sm:$0xff] %vm654, %v652
    %656 = vst.msk [vmem:[%s8 + $0x8] sm:$0xff] %vm654, %v653
    %658 = vset.pattern.permute.xlu0 0
    %659 = vperm.xlu0 %658, %v652
    %v660 = vpop.permute.xlu0 %659
    %663 = vset.pattern.permute.xlu0 0
    %664 = vperm.xlu0 %663, %v653
    %v665 = vpop.permute.xlu0 %664
    %v667 = vmul.f32 %v511, %v660
    %v668 = vmul.f32 %v512, %v665
    %669 = vst.msk [vmem:[#allocation7] sm:$0xff] %vm522, %v667
    %670 = vst.msk [vmem:[#allocation7 + $0x8] sm:$0xff] %vm522, %v668
    // Predicated region
    $region38: #{tpu_custom_call.1} parent=1 // pred_check
      _
    $region39: #{tpu_custom_call.1} parent=1 // pred_check_branch
      %672 = sbr.rel (0) target = $region41
    $region40: #{tpu_custom_call.1} parent=1 // pred_region
      %s674 = ssub.s32 256, 256
      %675 = vsyncadd [#allocation3], %s674
      %s676 = sshll.u32 [#allocation7], 4
      %s677 = int_to_ptr.vmem [resolvable:$true] %s676
      %682 = dma.vmem_to_hbm [thread:$0]  %s677, 256, %s7, [#allocation3], 128, 128, 8
    $region41: #{tpu_custom_call.1} parent=1 // pred_fallthru
      _
    // Predicated region
    $region42: #{tpu_custom_call.1} parent=1 // pred_check
      _
    $region43: #{tpu_custom_call.1} parent=1 // pred_check_branch
      %684 = sbr.rel (0) target = $region45
    $region44: #{tpu_custom_call.1} parent=1 // pred_region
      _
    $region45: #{tpu_custom_call.1} parent=1 // pred_fallthru
      _
    // Predicated region
    $region46: #{tpu_custom_call.1} parent=1 // pred_check
      _
    $region47: #{tpu_custom_call.1} parent=1 // pred_check_branch
      %686 = sbr.rel (0) target = $region49
    $region48: #{tpu_custom_call.1} parent=1 // pred_region
      %s688 = ssub.s32 256, 256
      %689 = vsyncadd [#allocation9], %s688
      %s690 = sshll.u32 [#allocation8], 4
      %s691 = int_to_ptr.vmem [resolvable:$true] %s690
      %696 = dma.vmem_to_hbm [thread:$0]  %s691, 256, %s9, [#allocation9], 128, 128, 8
    $region49: #{tpu_custom_call.1} parent=1 // pred_fallthru
      _
    // Predicated region
    $region50: #{tpu_custom_call.1} parent=1 // pred_check
      _
    $region51: #{tpu_custom_call.1} parent=1 // pred_check_branch
      %698 = sbr.rel (0) target = $region53
    $region52: #{tpu_custom_call.1} parent=1 // pred_region
      %699 = dma.done [#allocation3], 256
    $region53: #{tpu_custom_call.1} parent=1 // pred_fallthru
      _
    // Predicated region
    $region54: #{tpu_custom_call.1} parent=1 // pred_check
      _
    $region55: #{tpu_custom_call.1} parent=1 // pred_check_branch
      %701 = sbr.rel (0) target = $region57
    $region56: #{tpu_custom_call.1} parent=1 // pred_region
      _
    $region57: #{tpu_custom_call.1} parent=1 // pred_fallthru
      _
    // Predicated region
    $region58: #{tpu_custom_call.1} parent=1 // pred_check
      _
    $region59: #{tpu_custom_call.1} parent=1 // pred_check_branch
      %703 = sbr.rel (0) target = $region61
    $region60: #{tpu_custom_call.1} parent=1 // pred_region
      %704 = dma.done [#allocation9], 256
    $region61: #{tpu_custom_call.1} parent=1 // pred_fallthru
      _
    %705 = vsyncpa [#allocation3], 1
    %706 = vsyncpa [#allocation9], 1
    %707 = vsyncpa [#allocation4], 1
    %708 = vsyncpa [#allocation6], 1

</llo_original>
